<compile_context>
chip_gen: v7x
topology: tpu7x:2x2x1
jax: 0.10.0
libtpu: 0.0.40
codegen_flags: <defaults>
</compile_context>

<pallas_src>
import functools

import jax
import jax.numpy as jnp
from jax.experimental import pallas as pl
from jax.experimental.pallas import tpu as pltpu


def _rmsnorm_kernel(x_ref, w_ref, o_ref, *, eps):
    # x_ref block: (tr, D); w_ref block: (1, D); o_ref block: (tr, D)
    x32 = x_ref[...].astype(jnp.float32)
    mean_sq = jnp.mean(x32 * x32, axis=-1, keepdims=True)        # (tr, 1)
    inv_rms = jax.lax.rsqrt(mean_sq + eps)                       # EUP rsqrt
    y = (x32 * inv_rms) * w_ref[...].astype(jnp.float32)         # broadcast (1, D)
    o_ref[...] = y.astype(o_ref.dtype)


def _sublane_multiple(dtype) -> int:
    """Dtype-correct sublane packing multiple: 8 (f32), 16 (bf16), 32 (int8/fp8)."""
    itemsize = jnp.dtype(dtype).itemsize
    return max(8, 32 // max(1, itemsize))


def _vmem_capacity_bytes() -> int:
    """Physical VMEM of the current chip; conservative 64 MiB fallback."""
    try:
        return int(pltpu.get_tpu_info().vmem_capacity_bytes)
    except Exception:
        return 64 * 1024 * 1024  # v7x-sized fallback (safe on v5e/v6e too)


def _pick_block_rows(R: int, D: int, dtype) -> int:
    """Byte-targeted row-tile size.

    Budgets: 2x double-buffered input block + 2x double-buffered output block
    + ~2 f32 copies of the block (materialized x32 / y intermediates), keeping
    the working set well under the chip's VMEM.  Also targets a large-enough
    block (~8 MiB of input) so the ~0.35us per-grid-step overhead is amortized.
    """
    itemsize = jnp.dtype(dtype).itemsize
    sub = _sublane_multiple(dtype)

    vmem_cap = _vmem_capacity_bytes()
    budget = int(vmem_cap * 0.6)  # leave headroom for compiler/internal scratch

    # VMEM bytes consumed per row of the tile.
    per_row = D * (2 * itemsize + 2 * itemsize + 2 * 4)
    tr_vmem = max(1, budget // max(1, per_row))

    # Amortize per-step overhead: ~8 MiB of input per block.
    target_block_bytes = 8 * 1024 * 1024
    tr_target = max(1, target_block_bytes // max(1, D * itemsize))

    tr = min(tr_vmem, tr_target, R)

    # Keep at least 2 grid steps when R allows it, so v7x's two TensorCores
    # both get work on the "parallel" axis.
    if tr >= R and R > 2 * sub:
        tr = pl.cdiv(R, 2)

    if tr >= R:
        return R  # single full-extent block (allowed even if R % sub != 0)

    # Round down to the sublane multiple; ragged last block handled by cdiv grid.
    tr = max(sub, (tr // sub) * sub)
    return min(tr, R)


def rmsnorm(x, weight, *, eps=1e-5):
    """x: (..., D) any float dtype. weight: (D,). Returns same shape/dtype as x."""
    orig_shape = x.shape
    D = orig_shape[-1]
    assert weight.shape == (D,)

    x2 = x.reshape(-1, D)
    R = x2.shape[0]
    w2 = weight.reshape(1, D)

    tr = _pick_block_rows(R, D, x2.dtype)
    grid = (pl.cdiv(R, tr),)

    # Generation-aware scoped-VMEM request (~45 MiB on v7x, ~90 MiB on v5e/v6e),
    # leaving headroom instead of claiming the whole physical VMEM.
    vmem_limit = int(_vmem_capacity_bytes() * 0.7)

    out = pl.pallas_call(
        functools.partial(_rmsnorm_kernel, eps=eps),
        out_shape=jax.ShapeDtypeStruct((R, D), x.dtype),
        grid_spec=pltpu.PrefetchScalarGridSpec(
            num_scalar_prefetch=0,
            grid=grid,
            in_specs=[
                pl.BlockSpec((tr, D), lambda i: (i, 0)),   # x row tile
                pl.BlockSpec((1, D), lambda i: (0, 0)),    # weight (VMEM resident)
            ],
            out_specs=pl.BlockSpec((tr, D), lambda i: (i, 0)),
        ),
        compiler_params=pltpu.CompilerParams(
            dimension_semantics=("parallel",),
            vmem_limit_bytes=vmem_limit,
        ),
    )(x2, w2)
    return out.reshape(orig_shape)


def _reference(x, weight, eps=1e-5):
    """Pure-JAX mirror of the PyTorch forward."""
    x32 = x.astype(jnp.float32)
    mean_sq = jnp.mean(x32 * x32, axis=-1, keepdims=True)
    y = x32 / jnp.sqrt(mean_sq + eps) * weight.astype(jnp.float32)
    return y.astype(x.dtype)


if __name__ == "__main__":
    key = jax.random.PRNGKey(0)
    k1, k2, k3, k4 = jax.random.split(key, 4)

    # Small shape consistent with the module: batch=2, seq=8, d_model=32.
    B, L, D = 2, 8, 32
    x = jax.random.normal(k1, (B, L, D), jnp.float32)
    w = 1.0 + 0.1 * jax.random.normal(k2, (D,), jnp.float32)

    out = jax.block_until_ready(rmsnorm(x, w, eps=1e-5))
    ref = _reference(x, w, eps=1e-5)
    assert out.shape == x.shape and out.dtype == x.dtype
    assert jnp.allclose(out, ref, atol=1e-5, rtol=1e-5), "f32 mismatch vs reference"

    # A larger case that exercises the tiled (grid > 1) path, including the
    # >=2-grid-steps split and a ragged last block (R=1000 not a tile multiple).
    B2, L2, D2 = 4, 250, 128
    x2 = jax.random.normal(k3, (B2, L2, D2), jnp.float32)
    w2 = 1.0 + 0.1 * jax.random.normal(k4, (D2,), jnp.float32)
    out2 = jax.block_until_ready(rmsnorm(x2, w2, eps=1e-5))
    ref2 = _reference(x2, w2, eps=1e-5)
    assert jnp.allclose(out2, ref2, atol=1e-5, rtol=1e-5), "tiled mismatch vs reference"

    # bf16 input: compute in f32, cast result back to bf16 (orig_dtype semantics);
    # tile rounds to the bf16 sublane multiple of 16.
    x3 = x2.astype(jnp.bfloat16)
    out3 = jax.block_until_ready(rmsnorm(x3, w2, eps=1e-5))
    ref3 = _reference(x3, w2, eps=1e-5)
    assert out3.dtype == jnp.bfloat16
    assert jnp.allclose(out3.astype(jnp.float32), ref3.astype(jnp.float32),
                        atol=2e-2, rtol=2e-2), "bf16 mismatch vs reference"

    print("KERNEL_OK")
</pallas_src>

<mosaic_0001>
module attributes {stable_mosaic.version = 11 : i64} {
  func.func @_rmsnorm_kernel(%arg0: i32, %arg1: memref<16x32xf32, #tpu.memory_space<vmem>>, %arg2: memref<1x32xf32, #tpu.memory_space<vmem>>, %arg3: memref<16x32xf32, #tpu.memory_space<vmem>>) attributes {dimension_semantics = [#tpu.dimension_semantics<parallel>], iteration_bounds = array<i64: 1>, scalar_prefetch = 0 : i64, scratch_operands = 0 : i64, tpu.core_type = #tpu.core_type<tc>, window_params = [{transform_indices = @transform_0, window_bounds = array<i64: 16, 32>}, {pipeline_mode = #tpu.pipeline_mode<synchronous>, transform_indices = @transform_1, window_bounds = array<i64: 1, 32>}, {transform_indices = @transform_2, window_bounds = array<i64: 16, 32>}]} {
    %c0 = arith.constant 0 : index
    %c0_0 = arith.constant 0 : index
    %0 = vector.load %arg1[%c0, %c0_0] : memref<16x32xf32, #tpu.memory_space<vmem>>, vector<16x32xf32>
    %1 = arith.mulf %0, %0 : vector<16x32xf32>
    %cst = arith.constant dense<0.000000e+00> : vector<16xf32>
    %2 = vector.multi_reduction <add>, %1, %cst [1] : vector<16x32xf32> to vector<16xf32>
    %3 = vector.shape_cast %2 : vector<16xf32> to vector<16x1xf32>
    %cst_1 = arith.constant 3.200000e+01 : f32
    %4 = vector.broadcast %cst_1 : f32 to vector<16x1xf32>
    %5 = arith.divf %3, %4 : vector<16x1xf32>
    %cst_2 = arith.constant 9.99999974E-6 : f32
    %6 = vector.broadcast %cst_2 : f32 to vector<16x1xf32>
    %7 = arith.addf %5, %6 : vector<16x1xf32>
    %8 = math.rsqrt %7 : vector<16x1xf32>
    %9 = vector.broadcast %8 : vector<16x1xf32> to vector<16x32xf32>
    %10 = arith.mulf %0, %9 : vector<16x32xf32>
    %c0_3 = arith.constant 0 : index
    %c0_4 = arith.constant 0 : index
    %11 = vector.load %arg2[%c0_3, %c0_4] : memref<1x32xf32, #tpu.memory_space<vmem>>, vector<1x32xf32>
    %12 = vector.broadcast %11 : vector<1x32xf32> to vector<16x32xf32>
    %13 = arith.mulf %10, %12 : vector<16x32xf32>
    %c0_5 = arith.constant 0 : index
    %c0_6 = arith.constant 0 : index
    %14 = vector.load %arg3[%c0_5, %c0_6] : memref<16x32xf32, #tpu.memory_space<vmem>>, vector<16x32xf32>
    tpu.vector_store %arg3[%c0_5, %c0_6], %13 {strides = array<i32>} : memref<16x32xf32, #tpu.memory_space<vmem>>, vector<16x32xf32>,
    return
  }
  func.func @transform_0(%arg0: i32) -> (i32, i32) {
    %c0_i32 = arith.constant 0 : i32
    %c0_i32_0 = arith.constant 0 : i32
    return %arg0, %c0_i32 : i32, i32
  }
  func.func @transform_1(%arg0: i32) -> (i32, i32) {
    %c0_i32 = arith.constant 0 : i32
    %c0_i32_0 = arith.constant 0 : i32
    %c0_i32_1 = arith.constant 0 : i32
    return %c0_i32, %c0_i32_0 : i32, i32
  }
  func.func @transform_2(%arg0: i32) -> (i32, i32) {
    %c0_i32 = arith.constant 0 : i32
    %c0_i32_0 = arith.constant 0 : i32
    return %arg0, %c0_i32 : i32, i32
  }
}

</mosaic_0001>

<llo_original>
// kernel: tpu_custom_call.1
$region0: #{tpu_custom_call.1}
  #allocation0 [shape = 'u32[]', space=smem, size = 0x4, offset = 0x4, fixed_abs, tag = 'smem constant byte address 0x4 - core index']
  #allocation1 [shape = 'u32[144,128]{1,0:T(1,128)}', space=vmem, size = 0x12000, scoped, tag = 'internal scratch']
  %s0 = inlined_call_operand.hbm [shape: f32[16,32], index: 0, kind: input, shape index: {}]
  %s1 = inlined_call_operand.vmem [shape: f32[1,32], index: 1, kind: input, shape index: {}]
  %s2 = inlined_call_operand.hbm [shape: f32[16,32], index: 2, kind: output, shape index: {}]
  %s3 = sld [smem:[#allocation0]]
  $region22: #{tpu_custom_call.1} parent=0
    _
  %s5 = ssub.s32 1, %s3
  %s6 = scalar_select 0, %s5, %s3
  $region1: #{tpu_custom_call.1} parent=0
    #allocation2 [shape = 'u8[8192]{0}', space=vmem, size = 0x2000, scoped, tag = 'input window, operand 0, single buffered']
    #allocation3 [shape = 's32[1]{0}', space=sflag, size = 0x4, scoped, tag = 'scoped memory for tpu_custom_call.1']
    #allocation4 [shape = 's32[1]{0}', space=sflag, size = 0x4, scoped, tag = 'scoped memory for tpu_custom_call.1']
    #allocation5 [shape = 'u8[8192]{0}', space=vmem, size = 0x2000, scoped, tag = 'output window, operand 0, single buffered']
    %7 = vsyncpa [#allocation3], 0
    %8 = vsyncpa [#allocation4], 0
    // Predicated region
    $region2: #{tpu_custom_call.1} parent=1 // pred_check
      _
    $region3: #{tpu_custom_call.1} parent=1 // pred_check_branch
      %10 = sbr.rel (0) target = $region5
    $region4: #{tpu_custom_call.1} parent=1 // pred_region
      %s12 = ssub.s32 256, 256
      %13 = vsyncadd [#allocation3], %s12
      %s14 = sshll.u32 [#allocation2], 4
      %s15 = int_to_ptr.vmem [resolvable:$true] %s14
      %20 = dma.hbm_to_vmem [thread:$0]  %s0, 256, %s15, [#allocation3], 128, 128, 8
    $region5: #{tpu_custom_call.1} parent=1 // pred_fallthru
      _
    // Predicated region
    $region6: #{tpu_custom_call.1} parent=1 // pred_check
      _
    $region7: #{tpu_custom_call.1} parent=1 // pred_check_branch
      %22 = sbr.rel (0) target = $region9
    $region8: #{tpu_custom_call.1} parent=1 // pred_region
      _
    $region9: #{tpu_custom_call.1} parent=1 // pred_fallthru
      _
    // Predicated region
    $region10: #{tpu_custom_call.1} parent=1 // pred_check
      _
    $region11: #{tpu_custom_call.1} parent=1 // pred_check_branch
      %24 = sbr.rel (0) target = $region13
    $region12: #{tpu_custom_call.1} parent=1 // pred_region
      %25 = dma.done [#allocation3], 256
    $region13: #{tpu_custom_call.1} parent=1 // pred_fallthru
      _
    %v26 = vld [vmem:[#allocation2] sm:$0xff]
    %v27 = vld [vmem:[#allocation2 + $0x8] sm:$0xff]
    %v28 = vmul.f32 %v26, %v26
    %v29 = vmul.f32 %v27, %v27
    %vm30 = vcmask 261120
    %v31 = vsel %vm30, %v28, 0.0
    %32 = vadd.xlane.f32.xlu0 %v31
    %v33 = vpop.xlane.xlu0 %32
    %v34 = vsel %vm30, %v29, 0.0
    %35 = vadd.xlane.f32.xlu0 %v34
    %v36 = vpop.xlane.xlu0 %35
    %v37 = vrcp.pop 32.0
    %v38 = vmul.f32 %v33, %v37
    %v39 = vmul.f32 %v36, %v37
    %v40 = vadd.f32 %v38, 1e-05
    %v41 = vadd.f32 %v39, 1e-05
    %v42 = vrsqrt.pop %v40
    %v43 = vrsqrt.pop %v41
    %v44 = vmul.f32 %v26, %v42
    %v45 = vmul.f32 %v27, %v43
    %v46 = vld [vmem:[%s1] sm:$0x1]
    %v48 = vlaneseq
    %v49 = vshrl.u32 %v48, 7
    %v50 = vsub.s32 0, %v49
    %v51 = vrot.slane %v46, %v50
    %v53 = vmul.f32 %v44, %v51
    %v54 = vmul.f32 %v45, %v51
    %55 = vst.msk [vmem:[#allocation5] sm:$0xff] %vm30, %v53
    %56 = vst.msk [vmem:[#allocation5 + $0x8] sm:$0xff] %vm30, %v54
    // Predicated region
    $region14: #{tpu_custom_call.1} parent=1 // pred_check
      _
    $region15: #{tpu_custom_call.1} parent=1 // pred_check_branch
      %58 = sbr.rel (0) target = $region17
    $region16: #{tpu_custom_call.1} parent=1 // pred_region
      %s60 = ssub.s32 256, 256
      %61 = vsyncadd [#allocation4], %s60
      %s62 = sshll.u32 [#allocation5], 4
      %s63 = int_to_ptr.vmem [resolvable:$true] %s62
      %68 = dma.vmem_to_hbm [thread:$0]  %s63, 256, %s2, [#allocation4], 128, 128, 8
    $region17: #{tpu_custom_call.1} parent=1 // pred_fallthru
      _
    // Predicated region
    $region18: #{tpu_custom_call.1} parent=1 // pred_check
      _
    $region19: #{tpu_custom_call.1} parent=1 // pred_check_branch
      %70 = sbr.rel (0) target = $region21
    $region20: #{tpu_custom_call.1} parent=1 // pred_region
      %71 = dma.done [#allocation4], 256
    $region21: #{tpu_custom_call.1} parent=1 // pred_fallthru
      _
    %72 = vsyncpa [#allocation3], 1
    %73 = vsyncpa [#allocation4], 1

</llo_original>
